<compile_context>
chip_gen: v6e
topology: v6e:2x2x1
jax: 0.10.0
libtpu: 0.0.40
codegen_flags: <defaults>
</compile_context>

<pallas_src>
import jax
import jax.numpy as jnp
from jax.experimental import pallas as pl
from jax.experimental.pallas import tpu as pltpu


def dense_kernel(x_ref, wt_ref, b_ref, o_ref):
    # x_ref : (B, D) in VMEM
    # wt_ref: (1, D) in VMEM  (weight row -> lane-dense, broadcasts over batch)
    # b_ref : (1,)   in SMEM  (scalar bias)
    # o_ref : (B, 1) in VMEM
    x = x_ref[...]                                   # VPU load
    w = wt_ref[...]                                  # (1, D) broadcasts over B
    acc = jnp.sum(x * w, axis=-1, keepdims=True)     # VPU mul + XLU reduce, no MXU
    o_ref[...] = (acc + b_ref[0]).astype(o_ref.dtype)


def dense_forward(x, w, b):
    """y = x @ w + b for Dense(1), single-shot (grid-less) Pallas kernel."""
    B, D = x.shape
    Dw, N = w.shape
    assert Dw == D
    # VPU-mul + XLU-reduce path is only correct/fast for N == 1; wider outputs
    # should go through the MXU with a lane-dense output block instead.
    assert N == 1, "dense_forward Pallas kernel assumes Dense(1) (out_features == 1)"

    wt = w.reshape(1, D)                # layout-free for a (D,1) array (row-major)
    b1d = b.reshape(N)                  # (1,) scalar for SMEM (pads to 4 bytes)

    cost = pl.CostEstimate(
        flops=2 * B * D * N,
        bytes_accessed=(B * D + D * N + B * N) * 4,
        transcendentals=0,
    )

    return pl.pallas_call(
        dense_kernel,
        out_shape=jax.ShapeDtypeStruct((B, N), x.dtype),
        in_specs=[
            pl.BlockSpec(memory_space=pltpu.MemorySpace.VMEM),   # x
            pl.BlockSpec(memory_space=pltpu.MemorySpace.VMEM),   # w row
            pl.BlockSpec(memory_space=pltpu.MemorySpace.SMEM),   # bias scalar
        ],
        out_specs=pl.BlockSpec(memory_space=pltpu.MemorySpace.VMEM),
        cost_estimate=cost,
    )(x, wt, b1d)


if __name__ == "__main__":
    key = jax.random.PRNGKey(0)
    kx, kw = jax.random.split(key)

    B, D, N = 8, 32, 1  # batch=8, in_features=32, Dense(1) -> out_features=1

    x = jax.random.normal(kx, (B, D), dtype=jnp.float32)
    # Deterministic parameter init (glorot-uniform-like scale for W, zeros for b),
    # matching the shapes implied by layers.Dense(1).
    limit = (6.0 / (D + N)) ** 0.5
    w = jax.random.uniform(kw, (D, N), minval=-limit, maxval=limit,
                           dtype=jnp.float32)
    b = jnp.zeros((N,), dtype=jnp.float32)

    y = dense_forward(x, w, b)
    y = jax.block_until_ready(y)

    # Reference check against plain JAX.
    y_ref = x @ w + b
    assert y.shape == (B, N)
    assert jnp.allclose(y, y_ref, atol=1e-5, rtol=1e-5)

    print("KERNEL_OK")
</pallas_src>

<mosaic_0001>
module attributes {stable_mosaic.version = 11 : i64} {
  func.func @dense_kernel(%arg0: memref<8x32xf32, #tpu.memory_space<vmem>>, %arg1: memref<1x32xf32, #tpu.memory_space<vmem>>, %arg2: memref<1xf32, #tpu.memory_space<smem>>, %arg3: memref<8x1xf32, #tpu.memory_space<vmem>>) attributes {dimension_semantics = [], scalar_prefetch = 0 : i64, scratch_operands = 0 : i64, tpu.core_type = #tpu.core_type<tc>} {
    %c0 = arith.constant 0 : index
    %c0_0 = arith.constant 0 : index
    %0 = vector.load %arg0[%c0, %c0_0] : memref<8x32xf32, #tpu.memory_space<vmem>>, vector<8x32xf32>
    %c0_1 = arith.constant 0 : index
    %c0_2 = arith.constant 0 : index
    %1 = vector.load %arg1[%c0_1, %c0_2] : memref<1x32xf32, #tpu.memory_space<vmem>>, vector<1x32xf32>
    %2 = vector.broadcast %1 : vector<1x32xf32> to vector<8x32xf32>
    %3 = arith.mulf %0, %2 : vector<8x32xf32>
    %cst = arith.constant dense<0.000000e+00> : vector<8xf32>
    %4 = vector.multi_reduction <add>, %3, %cst [1] : vector<8x32xf32> to vector<8xf32>
    %5 = vector.shape_cast %4 : vector<8xf32> to vector<8x1xf32>
    %c0_3 = arith.constant 0 : index
    %6 = memref.load %arg2[%c0_3] : memref<1xf32, #tpu.memory_space<smem>>
    %7 = vector.broadcast %6 : f32 to vector<8x1xf32>
    %8 = arith.addf %5, %7 : vector<8x1xf32>
    %c0_4 = arith.constant 0 : index
    %c0_5 = arith.constant 0 : index
    %9 = vector.load %arg3[%c0_4, %c0_5] : memref<8x1xf32, #tpu.memory_space<vmem>>, vector<8x1xf32>
    tpu.vector_store %arg3[%c0_4, %c0_5], %8 {strides = array<i32>} : memref<8x1xf32, #tpu.memory_space<vmem>>, vector<8x1xf32>,
    return
  }
}

</mosaic_0001>

<llo_original>
// kernel: tpu_custom_call.1
$region0: #{tpu_custom_call.1}
  #allocation0 [shape = 'u32[]', space=smem, size = 0x4, offset = 0x4, fixed_abs, tag = 'smem constant byte address 0x4 - core index']
  #allocation1 [shape = 'u32[144,128]{1,0:T(1,128)}', space=vmem, size = 0x12000, scoped, tag = 'internal scratch']
  #allocation2 [shape = 'f32[1]{0:T(128)S(6)}', space=smem, size = 0x200, scoped, tag = 'scoped memory for tpu_custom_call.1']
  %s0 = inlined_call_operand.hbm [shape: f32[8,32], index: 0, kind: input, shape index: {}]
  %s1 = inlined_call_operand.vmem [shape: f32[1,32], index: 1, kind: input, shape index: {}]
  %s2 = inlined_call_operand.<no memory space> [shape: f32[1], index: 2, kind: input, shape index: {}]
  %s3 = inlined_call_operand.vmem [shape: f32[8,1], index: 3, kind: output, shape index: {}]
  %s4 = sld [smem:[#allocation0]]
  $region26: #{tpu_custom_call.1} parent=0
    _
  %s6 = ssub.s32 1, %s4
  %s7 = scalar_select 0, %s6, %s4
  %8 = sst [smem:[#allocation2]] %s2
  $region1: #{tpu_custom_call.1} parent=0
    #allocation3 [shape = 'u8[4096]{0}', space=vmem, size = 0x1000, scoped, tag = 'input window, operand 0, single buffered']
    #allocation4 [shape = 's32[1]{0}', space=sflag, size = 0x4, scoped, tag = 'scoped memory for tpu_custom_call.1']
    %9 = vsyncpa [#allocation4], 0
    // Predicated region
    $region2: #{tpu_custom_call.1} parent=1 // pred_check
      _
    $region3: #{tpu_custom_call.1} parent=1 // pred_check_branch
      %11 = sbr.rel (0) target = $region5
    $region4: #{tpu_custom_call.1} parent=1 // pred_region
      %s13 = ssub.s32 128, 128
      %14 = vsyncadd [#allocation4], %s13
      %s16 = sshll.u32 [#allocation3], 4
      %s17 = int_to_ptr.vmem [resolvable:$true] %s16
      %19 = dma.hbm_to_vmem [thread:$0]  %s0, 128, %s17, [#allocation4]
    $region5: #{tpu_custom_call.1} parent=1 // pred_fallthru
      _
    // Predicated region
    $region6: #{tpu_custom_call.1} parent=1 // pred_check
      _
    $region7: #{tpu_custom_call.1} parent=1 // pred_check_branch
      %21 = sbr.rel (0) target = $region9
    $region8: #{tpu_custom_call.1} parent=1 // pred_region
      _
    $region9: #{tpu_custom_call.1} parent=1 // pred_fallthru
      _
    // Predicated region
    $region10: #{tpu_custom_call.1} parent=1 // pred_check
      _
    $region11: #{tpu_custom_call.1} parent=1 // pred_check_branch
      %23 = sbr.rel (0) target = $region13
    $region12: #{tpu_custom_call.1} parent=1 // pred_region
      _
    $region13: #{tpu_custom_call.1} parent=1 // pred_fallthru
      _
    // Predicated region
    $region14: #{tpu_custom_call.1} parent=1 // pred_check
      _
    $region15: #{tpu_custom_call.1} parent=1 // pred_check_branch
      %25 = sbr.rel (0) target = $region17
    $region16: #{tpu_custom_call.1} parent=1 // pred_region
      %26 = dma.done [#allocation4], 128
    $region17: #{tpu_custom_call.1} parent=1 // pred_fallthru
      _
    %v27 = vld [vmem:[#allocation3] sm:$0xff]
    %v28 = vld [vmem:[%s1] sm:$0x1]
    %v30 = vlaneseq
    %v31 = vshrl.u32 %v30, 7
    %v32 = vsub.s32 0, %v31
    %v33 = vrot.slane %v28, %v32
    %v35 = vmul.f32 %v27, %v33
    %vm36 = vcmask 261120
    %v37 = vsel %vm36, %v35, 0.0
    %38 = vadd.xlane.f32.xlu0 %v37
    %v39 = vpop.xlane.xlu0 %38
    %s40 = sld [smem:[#allocation2]]
    %v41 = vstv %s40
    %v42 = vadd.f32 %v39, %v41
    %vm43 = vcmask 7168
    %44 = vst.msk [vmem:[%s3] sm:$0xff] %vm43, %v42
    // Predicated region
    $region18: #{tpu_custom_call.1} parent=1 // pred_check
      _
    $region19: #{tpu_custom_call.1} parent=1 // pred_check_branch
      %46 = sbr.rel (0) target = $region21
    $region20: #{tpu_custom_call.1} parent=1 // pred_region
      _
    $region21: #{tpu_custom_call.1} parent=1 // pred_fallthru
      _
    // Predicated region
    $region22: #{tpu_custom_call.1} parent=1 // pred_check
      _
    $region23: #{tpu_custom_call.1} parent=1 // pred_check_branch
      %48 = sbr.rel (0) target = $region25
    $region24: #{tpu_custom_call.1} parent=1 // pred_region
      _
    $region25: #{tpu_custom_call.1} parent=1 // pred_fallthru
      _
    %49 = vsyncpa [#allocation4], 1

</llo_original>
